<compile_context>
chip_gen: v5e
topology: v5e:2x2
jax: 0.10.0
libtpu: 0.0.40
codegen_flags: <defaults>
</compile_context>

<pallas_src>
import functools

import jax
import jax.numpy as jnp
from jax.experimental import pallas as pl
from jax.experimental.pallas import tpu as pltpu


def _glu_kernel(x_ref, w_ref, b_ref, o_ref):
    # x_ref: (tf, e_flat); w_ref: (e_flat, 2*e_flat); b_ref: (1, 2*e_flat) f32
    e_flat = x_ref.shape[-1]
    x = x_ref[...]
    # Cast for the MXU only (no-op when the fused weight is f32); accumulate in f32.
    z = jnp.dot(x.astype(w_ref.dtype), w_ref[...],
                preferred_element_type=jnp.float32) + b_ref[...]
    gate = jax.nn.sigmoid(z[:, :e_flat])          # EUP
    z2 = z[:, e_flat:]
    xf = x.astype(jnp.float32)                    # f32 blend (v5e has no bf16 VPU)
    o_ref[...] = (xf + gate * (z2 - xf)).astype(o_ref.dtype)


def _round_up(v, m):
    return ((v + m - 1) // m) * m


def _vmem_budget_bytes():
    """Generation-aware scoped-VMEM limit + tile budget (v7x has only 64 MiB/TC)."""
    try:
        cap = int(pltpu.get_tpu_info().vmem_capacity_bytes)
    except Exception:
        cap = 128 * 1024 * 1024
    limit = min(cap // 2, 64 * 1024 * 1024)       # 32 MiB on v7x, 64 MiB on v5e/v6e
    budget = (limit * 3) // 4                     # headroom for compiler scratch
    return limit, budget


def _choose_tile_rows(m_flat, e_flat, itemsize, w_bytes, budget, max_tile_rows=None):
    """Largest flat-row tile under the VMEM budget (GROWN, not just shrunk),
    sublane-aligned for the activation dtype, capped so >= ~8 grid steps remain
    on large inputs (megacore + pipelining), and clipped to the actual rows."""
    align = max(8, 32 // itemsize)                # 8 f32 / 16 bf16 / 32 int8 sublanes

    def vmem_use(t):
        io = 2 * 2 * t * e_flat * itemsize        # x + out tiles, double-buffered
        tmp = 3 * t * 2 * e_flat * 4              # z / gate / blend temporaries (f32)
        return io + tmp + w_bytes

    tf = align                                    # grow up to the budget
    while 2 * tf <= 65536 and vmem_use(2 * tf) <= budget:
        tf *= 2
    # Keep >= 8 grid steps when each step would still move a near-roofline tile
    # (>= 512 flat rows ~= 256 KiB at 128 lanes f32).
    if pl.cdiv(m_flat, 8) >= 512:
        tf = min(tf, _round_up(pl.cdiv(m_flat, 8), align))
    if max_tile_rows is not None:
        tf = min(tf, _round_up(max_tile_rows, align))
    if tf >= m_flat:                              # tiny input: one full-extent block
        return m_flat
    return max(tf, align)


@functools.partial(jax.jit, static_argnames=("mxu_dtype", "max_tile_rows"))
def glu_activation(x, w1, b1, w2, b2, *, mxu_dtype=None, max_tile_rows=None):
    """x: (B, S, E). w1/w2: (E, E) conv weights laid out (E_in, E_out); b1/b2: (1, E).
    Returns (B, 1, S, E), matching the PyTorch module output.
    mxu_dtype: optional dtype (e.g. jnp.bfloat16) for the matmul operands only;
    accumulation and the blend stay f32."""
    B, S, E = x.shape
    M = B * S

    # Lane-packing factor: pack P rows into one 128-lane flat row when E | 128.
    P = 128 // E if (E < 128 and 128 % E == 0) else 1
    if M % P != 0:
        # Fall back to unpacked rows rather than paying a pad + slice HBM copy.
        P = 1
    # TODO(synk): E that neither divides 128 nor is a multiple of 128 (e.g. 48, 192)
    # runs with full-E blocks and masked partial stores; padding the feature axis
    # to a lane-friendly width would make those configs lane-dense too.
    e_flat = P * E

    w_dtype = jnp.dtype(mxu_dtype) if mxu_dtype is not None else x.dtype

    # Fused (block-diagonal when P > 1) weights and bias: one matmul -> [z1 | z2].
    eye = jnp.eye(P, dtype=w1.dtype)
    wg = jnp.concatenate([jnp.kron(eye, w1), jnp.kron(eye, w2)], axis=1).astype(w_dtype)
    bg = jnp.concatenate([jnp.tile(b1, (1, P)), jnp.tile(b2, (1, P))],
                         axis=1).astype(jnp.float32)            # bias stays f32

    m_flat = M // P
    x_flat = x.reshape(m_flat, e_flat)                          # free (row-major view)

    vmem_limit, budget = _vmem_budget_bytes()
    w_bytes = 2 * (wg.size * wg.dtype.itemsize + bg.size * 4)   # double-buffered w+b
    tf = _choose_tile_rows(m_flat, e_flat, x.dtype.itemsize, w_bytes, budget,
                           max_tile_rows)
    n_tiles = pl.cdiv(m_flat, tf)

    cost = pl.CostEstimate(
        flops=2 * m_flat * e_flat * 2 * e_flat + 6 * m_flat * e_flat,
        transcendentals=m_flat * e_flat,
        bytes_accessed=2 * m_flat * e_flat * x.dtype.itemsize   # x read + out write
        + wg.size * wg.dtype.itemsize + bg.size * 4,
    )

    out_flat = pl.pallas_call(
        _glu_kernel,
        out_shape=jax.ShapeDtypeStruct((m_flat, e_flat), x.dtype),
        grid_spec=pltpu.PrefetchScalarGridSpec(
            num_scalar_prefetch=0,
            grid=(n_tiles,),
            in_specs=[
                pl.BlockSpec((tf, e_flat), lambda i: (i, 0)),          # x tile
                # loop-invariant fused weight/bias (constant index_map -> one fetch)
                pl.BlockSpec((e_flat, 2 * e_flat), lambda i: (0, 0)),  # [w1|w2]
                pl.BlockSpec((1, 2 * e_flat), lambda i: (0, 0)),       # [b1|b2]
            ],
            out_specs=pl.BlockSpec((tf, e_flat), lambda i: (i, 0)),
        ),
        compiler_params=pltpu.CompilerParams(
            dimension_semantics=("parallel",),      # shard M-tiles across TCs (v7x)
            vmem_limit_bytes=vmem_limit,
        ),
        cost_estimate=cost,
    )(x_flat, wg, bg)

    return out_flat.reshape(B, 1, S, E)             # free (row-major view)


def _reference(x, w1, b1, w2, b2):
    # Pure-JAX reference of the PyTorch forward.
    z1 = jnp.einsum("bse,ec->bsc", x, w1) + b1[0]
    z2 = jnp.einsum("bse,ec->bsc", x, w2) + b2[0]
    g = jax.nn.sigmoid(z1)
    out = x * (1.0 - g) + z2 * g
    return out[:, None, :, :]


if __name__ == "__main__":
    # Module-consistent small shapes: B=2, f=5 -> S = f*(f-1) = 20, embed_dim = 32.
    B, S, E = 2, 20, 32
    key = jax.random.PRNGKey(0)
    kx, kw1, kb1, kw2, kb2 = jax.random.split(key, 5)

    x = jax.random.normal(kx, (B, S, E), dtype=jnp.float32)

    # Conv2d(1, E, (1, E)) weight is (E_out, 1, 1, E_in); flatten to (E_out, E_in),
    # then transpose to (E_in, E_out) for the x @ W layout used by the kernel.
    bound = 1.0 / jnp.sqrt(jnp.float32(E))            # PyTorch default init scale
    w1 = jax.random.uniform(kw1, (E, E), jnp.float32, -bound, bound).T
    b1 = jax.random.uniform(kb1, (1, E), jnp.float32, -bound, bound)
    w2 = jax.random.uniform(kw2, (E, E), jnp.float32, -bound, bound).T
    b2 = jax.random.uniform(kb2, (1, E), jnp.float32, -bound, bound)

    ref = _reference(x, w1, b1, w2, b2)

    # 1) f32 path, single full-extent block (m_flat = 10).
    out = jax.block_until_ready(glu_activation(x, w1, b1, w2, b2))
    assert out.shape == (B, 1, S, E)
    assert jnp.allclose(out, ref, atol=2e-5, rtol=2e-5), float(jnp.max(jnp.abs(out - ref)))

    # 2) bf16-MXU path (halved weight DMA; f32 accumulation + f32 blend).
    out_bf = jax.block_until_ready(
        glu_activation(x, w1, b1, w2, b2, mxu_dtype=jnp.bfloat16))
    assert jnp.allclose(out_bf, ref, atol=6e-2, rtol=0.0), \
        float(jnp.max(jnp.abs(out_bf - ref)))

    # 3) Multi-tile path with a ragged (clipped) tail block: m_flat = 630, tf = 128.
    Bl, Sl = 6, 420
    xl = jax.random.normal(kx, (Bl, Sl, E), dtype=jnp.float32)
    outl = jax.block_until_ready(
        glu_activation(xl, w1, b1, w2, b2, max_tile_rows=128))
    refl = _reference(xl, w1, b1, w2, b2)
    assert outl.shape == (Bl, 1, Sl, E)
    assert jnp.allclose(outl, refl, atol=2e-5, rtol=2e-5), \
        float(jnp.max(jnp.abs(outl - refl)))

    print("KERNEL_OK")
</pallas_src>

<mosaic_0001>
module attributes {stable_mosaic.version = 11 : i64} {
  func.func @_glu_kernel(%arg0: i32, %arg1: memref<10x128xf32, #tpu.memory_space<vmem>>, %arg2: memref<128x256xf32, #tpu.memory_space<vmem>>, %arg3: memref<1x256xf32, #tpu.memory_space<vmem>>, %arg4: memref<10x128xf32, #tpu.memory_space<vmem>>) attributes {dimension_semantics = [#tpu.dimension_semantics<parallel>], iteration_bounds = array<i64: 1>, scalar_prefetch = 0 : i64, scratch_operands = 0 : i64, tpu.core_type = #tpu.core_type<tc>, window_params = [{transform_indices = @transform_0, window_bounds = array<i64: 10, 128>}, {pipeline_mode = #tpu.pipeline_mode<synchronous>, transform_indices = @transform_1, window_bounds = array<i64: 128, 256>}, {pipeline_mode = #tpu.pipeline_mode<synchronous>, transform_indices = @transform_2, window_bounds = array<i64: 1, 256>}, {transform_indices = @transform_3, window_bounds = array<i64: 10, 128>}]} {
    %c0 = arith.constant 0 : index
    %c0_0 = arith.constant 0 : index
    %0 = vector.load %arg1[%c0, %c0_0] : memref<10x128xf32, #tpu.memory_space<vmem>>, vector<10x128xf32>
    %c0_1 = arith.constant 0 : index
    %c0_2 = arith.constant 0 : index
    %1 = vector.load %arg2[%c0_1, %c0_2] : memref<128x256xf32, #tpu.memory_space<vmem>>, vector<128x256xf32>
    %cst = arith.constant dense<0.000000e+00> : vector<10x256xf32>
    %2 = tpu.matmul %0, %1, %cst {dimension_numbers = #tpu.dot_dimension_numbers<[1], [0], [0], [1], [0, 0, 1, 1], [], []>} : vector<10x128xf32>, vector<128x256xf32>, vector<10x256xf32> -> vector<10x256xf32>
    %c0_3 = arith.constant 0 : index
    %c0_4 = arith.constant 0 : index
    %3 = vector.load %arg3[%c0_3, %c0_4] : memref<1x256xf32, #tpu.memory_space<vmem>>, vector<1x256xf32>
    %4 = vector.broadcast %3 : vector<1x256xf32> to vector<10x256xf32>
    %5 = arith.addf %2, %4 : vector<10x256xf32>
    %6 = vector.extract_strided_slice %5 {offsets = [0, 0], sizes = [10, 128], strides = [1, 1]} : vector<10x256xf32> to vector<10x128xf32>
    %7 = arith.negf %6 : vector<10x128xf32>
    %8 = math.exp %7 : vector<10x128xf32>
    %cst_5 = arith.constant 1.000000e+00 : f32
    %9 = vector.broadcast %cst_5 : f32 to vector<10x128xf32>
    %10 = arith.addf %9, %8 : vector<10x128xf32>
    %11 = arith.divf %9, %10 : vector<10x128xf32>
    %12 = vector.extract_strided_slice %5 {offsets = [0, 128], sizes = [10, 128], strides = [1, 1]} : vector<10x256xf32> to vector<10x128xf32>
    %13 = arith.subf %12, %0 : vector<10x128xf32>
    %14 = arith.mulf %11, %13 : vector<10x128xf32>
    %15 = arith.addf %0, %14 : vector<10x128xf32>
    %c0_6 = arith.constant 0 : index
    %c0_7 = arith.constant 0 : index
    %16 = vector.load %arg4[%c0_6, %c0_7] : memref<10x128xf32, #tpu.memory_space<vmem>>, vector<10x128xf32>
    tpu.vector_store %arg4[%c0_6, %c0_7], %15 {strides = array<i32>} : memref<10x128xf32, #tpu.memory_space<vmem>>, vector<10x128xf32>,
    return
  }
  func.func @transform_0(%arg0: i32) -> (i32, i32) {
    %c0_i32 = arith.constant 0 : i32
    %c0_i32_0 = arith.constant 0 : i32
    return %arg0, %c0_i32 : i32, i32
  }
  func.func @transform_1(%arg0: i32) -> (i32, i32) {
    %c0_i32 = arith.constant 0 : i32
    %c0_i32_0 = arith.constant 0 : i32
    %c0_i32_1 = arith.constant 0 : i32
    return %c0_i32, %c0_i32_0 : i32, i32
  }
  func.func @transform_2(%arg0: i32) -> (i32, i32) {
    %c0_i32 = arith.constant 0 : i32
    %c0_i32_0 = arith.constant 0 : i32
    %c0_i32_1 = arith.constant 0 : i32
    return %c0_i32, %c0_i32_0 : i32, i32
  }
  func.func @transform_3(%arg0: i32) -> (i32, i32) {
    %c0_i32 = arith.constant 0 : i32
    %c0_i32_0 = arith.constant 0 : i32
    return %arg0, %c0_i32 : i32, i32
  }
}

</mosaic_0001>

<llo_original>
// kernel: glu_activation.1
$region0: #{glu_activation.1}
  #allocation0 [shape = 'u32[]', space=smem, size = 0x4, offset = 0x4, fixed_abs, tag = 'smem constant byte address 0x4 - core index']
  #allocation1 [shape = 'u32[72,128]{1,0:T(1,128)}', space=vmem, size = 0x9000, scoped, tag = 'internal scratch']
  %s0 = inlined_call_operand.vmem [shape: f32[10,128], index: 0, kind: input, shape index: {}]
  %s1 = inlined_call_operand.vmem [shape: f32[128,256], index: 1, kind: input, shape index: {}]
  %s2 = inlined_call_operand.vmem [shape: f32[1,256], index: 2, kind: input, shape index: {}]
  %s3 = inlined_call_operand.vmem [shape: f32[10,128], index: 3, kind: output, shape index: {}]
  %s4 = sld [smem:[#allocation0]]
  $region22: #{glu_activation.1} parent=0
    _
  %s6 = ssub.s32 1, %s4
  %s7 = scalar_select 0, %s6, %s4
  // Predicated region
  $region2: #{glu_activation.1} parent=0 // pred_check
    _
  $region3: #{glu_activation.1} parent=0 // pred_check_branch
    %9 = sbr.rel (0) target = $region5
  $region4: #{glu_activation.1} parent=0 // pred_region
    _
  $region5: #{glu_activation.1} parent=0 // pred_fallthru
    _
  // Predicated region
  $region6: #{glu_activation.1} parent=0 // pred_check
    _
  $region7: #{glu_activation.1} parent=0 // pred_check_branch
    %11 = sbr.rel (0) target = $region9
  $region8: #{glu_activation.1} parent=0 // pred_region
    _
  $region9: #{glu_activation.1} parent=0 // pred_fallthru
    _
  // Predicated region
  $region10: #{glu_activation.1} parent=0 // pred_check
    _
  $region11: #{glu_activation.1} parent=0 // pred_check_branch
    %13 = sbr.rel (0) target = $region13
  $region12: #{glu_activation.1} parent=0 // pred_region
    _
  $region13: #{glu_activation.1} parent=0 // pred_fallthru
    _
  %v14 = vld [vmem:[%s0] sm:$0xff]
  %v15 = vld [vmem:[%s0 + $0x8] sm:$0x3]
  %v16 = vld [vmem:[%s1] sm:$0xff]
  %v17 = vld [vmem:[%s1 + $0x8] sm:$0xff]
  %v18 = vld [vmem:[%s1 + $0x10] sm:$0xff]
  %v19 = vld [vmem:[%s1 + $0x18] sm:$0xff]
  %v20 = vld [vmem:[%s1 + $0x20] sm:$0xff]
  %v21 = vld [vmem:[%s1 + $0x28] sm:$0xff]
  %v22 = vld [vmem:[%s1 + $0x30] sm:$0xff]
  %v23 = vld [vmem:[%s1 + $0x38] sm:$0xff]
  %v24 = vld [vmem:[%s1 + $0x40] sm:$0xff]
  %v25 = vld [vmem:[%s1 + $0x48] sm:$0xff]
  %v26 = vld [vmem:[%s1 + $0x50] sm:$0xff]
  %v27 = vld [vmem:[%s1 + $0x58] sm:$0xff]
  %v28 = vld [vmem:[%s1 + $0x60] sm:$0xff]
  %v29 = vld [vmem:[%s1 + $0x68] sm:$0xff]
  %v30 = vld [vmem:[%s1 + $0x70] sm:$0xff]
  %v31 = vld [vmem:[%s1 + $0x78] sm:$0xff]
  %v32 = vld [vmem:[%s1 + $0x80] sm:$0xff]
  %v33 = vld [vmem:[%s1 + $0x88] sm:$0xff]
  %v34 = vld [vmem:[%s1 + $0x90] sm:$0xff]
  %v35 = vld [vmem:[%s1 + $0x98] sm:$0xff]
  %v36 = vld [vmem:[%s1 + $0xa0] sm:$0xff]
  %v37 = vld [vmem:[%s1 + $0xa8] sm:$0xff]
  %v38 = vld [vmem:[%s1 + $0xb0] sm:$0xff]
  %v39 = vld [vmem:[%s1 + $0xb8] sm:$0xff]
  %v40 = vld [vmem:[%s1 + $0xc0] sm:$0xff]
  %v41 = vld [vmem:[%s1 + $0xc8] sm:$0xff]
  %v42 = vld [vmem:[%s1 + $0xd0] sm:$0xff]
  %v43 = vld [vmem:[%s1 + $0xd8] sm:$0xff]
  %v44 = vld [vmem:[%s1 + $0xe0] sm:$0xff]
  %v45 = vld [vmem:[%s1 + $0xe8] sm:$0xff]
  %v46 = vld [vmem:[%s1 + $0xf0] sm:$0xff]
  %v47 = vld [vmem:[%s1 + $0xf8] sm:$0xff]
  %v48 = vld [vmem:[%s2] sm:$0x3]
  %v50 = vperm.slane %v48, 0
  %v51 = vperm.slane %v48, 1
  %54 = vmatpush.msra.mxu0 %v46
  %55 = vmatpush.msra.mxu0 %v44
  %56 = vmatpush.msra.mxu0 %v42
  %57 = vmatpush.msra.mxu0 %v40
  %58 = vmatpush.msra.mxu0 %v38
  %59 = vmatpush.msra.mxu0 %v36
  %60 = vmatpush.msra.mxu0 %v34
  %61 = vmatpush.msra.mxu0 %v32
  %62 = vmatpush.msra.mxu0 %v30
  %63 = vmatpush.msra.mxu0 %v28
  %64 = vmatpush.msra.mxu0 %v26
  %65 = vmatpush.msra.mxu0 %v24
  %66 = vmatpush.msra.mxu0 %v22
  %67 = vmatpush.msra.mxu0 %v20
  %68 = vmatpush.msra.mxu0 %v18
  %69 = vmatpush.msra.mxu0 %v16
  %70 = vmatmul.f32.gmra.mxu0 %v14
  %v71 = vpop.f32.mrf.mxu0
  %v72 = vadd.f32 %v50, %v71
  %73 = vmatmul.f32.gmra.mxu0 %v15
  %v74 = vpop.f32.mrf.mxu0
  %v75 = vadd.f32 %v50, %v74
  %76 = vdwg.mxu0
  %77 = vmatpush.msra.mxu0 %v47
  %78 = vmatpush.msra.mxu0 %v45
  %79 = vmatpush.msra.mxu0 %v43
  %80 = vmatpush.msra.mxu0 %v41
  %81 = vmatpush.msra.mxu0 %v39
  %82 = vmatpush.msra.mxu0 %v37
  %83 = vmatpush.msra.mxu0 %v35
  %84 = vmatpush.msra.mxu0 %v33
  %85 = vmatpush.msra.mxu0 %v31
  %86 = vmatpush.msra.mxu0 %v29
  %87 = vmatpush.msra.mxu0 %v27
  %88 = vmatpush.msra.mxu0 %v25
  %89 = vmatpush.msra.mxu0 %v23
  %90 = vmatpush.msra.mxu0 %v21
  %91 = vmatpush.msra.mxu0 %v19
  %92 = vmatpush.msra.mxu0 %v17
  %93 = vmatmul.f32.gmra.mxu0 %v14
  %v94 = vpop.f32.mrf.mxu0
  %v95 = vadd.f32 %v51, %v94
  %96 = vmatmul.f32.gmra.mxu0 %v15
  %v97 = vpop.f32.mrf.mxu0
  %v98 = vadd.f32 %v51, %v97
  %99 = vdwg.mxu0
  %v100 = vxor.u32 %v72, 2147483648
  %v101 = vxor.u32 %v75, 2147483648
  %v102 = vmul.f32 %v100, 1.442695
  %v103 = vpow.pop %v102
  %v104 = vmul.f32 %v101, 1.442695
  %v105 = vpow.pop %v104
  %v106 = vadd.f32 %v103, 1.0
  %v107 = vadd.f32 %v105, 1.0
  %v108 = vrcp.pop %v106
  %v109 = vmul.f32 %v106, %v108
  %v110 = vsub.f32 1.0, %v109
  %v111 = vmul.f32 %v108, %v110
  %v112 = vadd.f32 %v108, %v111
  %vm113 = vweird.f32 %v106
  %vm114 = vweird.f32 %v108
  %vm115 = vmor %vm113, %vm114
  %v116 = vsel %vm115, %v108, %v112
  %v117 = vand.u32 2147483647, %v106
  %vm118 = vcmp.eq.f32.partialorder %v117, 8.507059e+37
  %v119 = vand.u32 %v106, 2147483648
  %v120 = vor.u32 1.1754944e-38, %v119
  %v121 = vsel %vm118, %v120, %v116
  %v122 = vmul.f32 1.0, %v121
  %v123 = vrcp.pop %v107
  %v124 = vmul.f32 %v107, %v123
  %v125 = vsub.f32 1.0, %v124
  %v126 = vmul.f32 %v123, %v125
  %v127 = vadd.f32 %v123, %v126
  %vm128 = vweird.f32 %v107
  %vm129 = vweird.f32 %v123
  %vm130 = vmor %vm128, %vm129
  %v131 = vsel %vm130, %v123, %v127
  %v132 = vand.u32 2147483647, %v107
  %vm133 = vcmp.eq.f32.partialorder %v132, 8.507059e+37
  %v134 = vand.u32 %v107, 2147483648
  %v135 = vor.u32 1.1754944e-38, %v134
  %v136 = vsel %vm133, %v135, %v131
  %v137 = vmul.f32 1.0, %v136
  %v138 = vsub.f32 %v95, %v14
  %v139 = vsub.f32 %v98, %v15
  %v140 = vmul.f32 %v122, %v138
  %v141 = vmul.f32 %v137, %v139
  %v142 = vadd.f32 %v14, %v140
  %v143 = vadd.f32 %v15, %v141
  %144 = vst [vmem:[%s3] sm:$0xff] %v142
  %145 = vst [vmem:[%s3 + $0x8] sm:$0x3] %v143
  // Predicated region
  $region14: #{glu_activation.1} parent=0 // pred_check
    _
  $region15: #{glu_activation.1} parent=0 // pred_check_branch
    %147 = sbr.rel (0) target = $region17
  $region16: #{glu_activation.1} parent=0 // pred_region
    _
  $region17: #{glu_activation.1} parent=0 // pred_fallthru
    _
  // Predicated region
  $region18: #{glu_activation.1} parent=0 // pred_check
    _
  $region19: #{glu_activation.1} parent=0 // pred_check_branch
    %149 = sbr.rel (0) target = $region21
  $region20: #{glu_activation.1} parent=0 // pred_region
    _
  $region21: #{glu_activation.1} parent=0 // pred_fallthru
    _

</llo_original>
